<compile_context>
chip_gen: v6e
topology: v6e:2x2x1
jax: 0.10.0
libtpu: 0.0.40
codegen_flags: <defaults>
</compile_context>

<pallas_src>
import functools

import jax
import jax.numpy as jnp
import numpy as np
from jax import lax
from jax.experimental import pallas as pl
from jax.experimental.pallas import tpu as pltpu


def _round_up(x, m):
    return ((x + m - 1) // m) * m


def _multisupcon_kernel(anchor_ref, contrast_ref, lab_a_ref, lab_c_ref,
                        loss_ref, valid_ref,
                        pm_ref, m_ref, tot_ref, pos_ref, cnt_ref, *,
                        batch_real, n_views, block_b, temperature, threshold,
                        pad_cols):
    i = pl.program_id(0)          # anchor-row tile         (parallel)
    c = pl.program_id(1)          # contrast batch-col tile (reduction)
    v = pl.program_id(2)          # view index              (reduction, innermost)
    n_c = pl.num_programs(1)
    n_v = pl.num_programs(2)
    T = block_b
    inv_t = 1.0 / temperature

    # ---- init per-anchor-tile accumulators at the first reduction step -------
    @pl.when(jnp.logical_and(c == 0, v == 0))
    def _():
        m_ref[...] = jnp.full_like(m_ref, -jnp.inf)
        tot_ref[...] = jnp.zeros_like(tot_ref)
        pos_ref[...] = jnp.zeros_like(pos_ref)
        cnt_ref[...] = jnp.zeros_like(cnt_ref)

    # ---- label-similarity (Jaccard) mask tile: once per (i, c), reused across views
    @pl.when(v == 0)
    def _():
        la = lab_a_ref[...].astype(jnp.float32)                        # (T, C)
        lc = lab_c_ref[...].astype(jnp.float32)                        # (T, C)
        inter = lax.dot_general(la, lc, (((1,), (1,)), ((), ())),
                                preferred_element_type=jnp.float32)    # (T, T)
        rs_a = jnp.sum(la, axis=1, keepdims=True)                      # (T, 1)
        rs_c = jnp.transpose(jnp.sum(lc, axis=1, keepdims=True))       # (1, T)
        union = rs_a + rs_c - inter
        sim = inter / (union + 1e-6)
        pm = (sim >= threshold).astype(jnp.float32)
        if pad_cols:
            # Padded label rows give sim=0 (< 0.5), but keep this cheap guard so
            # degenerate thresholds <= 0 cannot over-count positives.
            col_gid0 = c * T + lax.broadcasted_iota(jnp.int32, (1, T), 1)
            pm = jnp.where(col_gid0 < batch_real, pm, 0.0)
        # f32 counts are exact up to 2^24 -- more than enough for realistic B*C.
        cnt_ref[...] += jnp.sum(pm, axis=1, keepdims=True)
        pm_ref[...] = pm.astype(pm_ref.dtype)      # stored bf16, values exactly 0/1

    # ---- online-softmax update over this (batch-tile, view) column block -----
    a = anchor_ref[...]                                                # (T, Dp) bf16
    ct = contrast_ref[...]                                             # (T, Dp) bf16
    dots = lax.dot_general(a, ct, (((1,), (1,)), ((), ())),
                           preferred_element_type=jnp.float32)         # (T, T) f32
    dots = dots * inv_t

    m_prev = m_ref[...]
    # The running max MUST include the self / pad columns (computed before any
    # masking) so it equals the reference logits_max and exponents never blow up.
    m_new = jnp.maximum(m_prev, jnp.max(dots, axis=1, keepdims=True))
    alpha = jnp.exp(m_prev - m_new)
    p = jnp.exp(dots - m_new)                                          # (T, T)
    m_ref[...] = m_new

    def accumulate(p_eff):
        tot_ref[...] = alpha * tot_ref[...] + jnp.sum(p_eff, axis=1, keepdims=True)
        pos_ref[...] = alpha * pos_ref[...] + jnp.sum(pm_ref[...] * p_eff,
                                                      axis=1, keepdims=True)

    # Masking only matters on the diagonal block at view 0 (self column) and,
    # when the batch is padded, on the last column tile.  Gate the (T,T) iota /
    # compare / select work behind that predicate; all other steps take the
    # mask-free fast path.
    needs_mask = jnp.logical_and(i == c, v == 0)
    if pad_cols:
        needs_mask = jnp.logical_or(needs_mask, c == n_c - 1)

    @pl.when(jnp.logical_not(needs_mask))
    def _():
        accumulate(p)

    @pl.when(needs_mask)
    def _():
        row_gid = i * T + lax.broadcasted_iota(jnp.int32, (T, 1), 0)
        col_gid = c * T + lax.broadcasted_iota(jnp.int32, (1, T), 1)
        keep = jnp.logical_not(jnp.logical_and(row_gid == col_gid, v == 0))
        if pad_cols:
            keep = jnp.logical_and(keep, col_gid < batch_real)
        accumulate(jnp.where(keep, p, 0.0))

    # ---- finalize on the last reduction step ----------------------------------
    @pl.when(jnp.logical_and(c == n_c - 1, v == n_v - 1))
    def _():
        la = lab_a_ref[...].astype(jnp.float32)
        rs = jnp.sum(la, axis=1, keepdims=True)
        sq = jnp.sum(la * la, axis=1, keepdims=True)
        sim_ii = sq / (2.0 * rs - sq + 1e-6)
        pdiag = (sim_ii >= threshold).astype(jnp.float32)              # pmask[i, i]
        npos = n_views * cnt_ref[...] - pdiag                          # positives, self excluded
        rg = i * T + lax.broadcasted_iota(jnp.int32, (T, 1), 0)
        has_pos = jnp.logical_and(npos > 0.0, rg < batch_real)
        ratio = pos_ref[...] / (tot_ref[...] + 1e-8)
        loss_ref[...] = jnp.where(has_pos, -jnp.log(ratio), 0.0)
        valid_ref[...] = has_pos.astype(jnp.float32)


def _default_block_b():
    """Per-generation anchor/contrast tile size (rows)."""
    try:
        kind = jax.devices()[0].device_kind.lower()
    except Exception:
        return 256
    if "v6" in kind:
        return 512      # v6e: T=256 is HBM-bound (ridge ~650 flops/B); 128 MiB VMEM absorbs 512
    return 256          # v5e at its ridge; v7x near the knee with 64 MiB VMEM/TC


def _vmem_limit_bytes(T, D_pad, C, feat_bytes):
    """Tile-size-derived VMEM budget, clamped to 80% of the chip's capacity."""
    need = (2 * 2 * T * D_pad * feat_bytes   # anchor + contrast, double-buffered
            + 2 * 2 * T * C * 4              # label streams, double-buffered
            + T * T * 2                      # bf16 pm mask scratch
            + 8 * T * T * 4                  # headroom: Mosaic (T,T) f32 temps (dots, p, selects)
            + 64 * T * 4                     # small (T,1) scratches + outputs
            + (2 << 20))                     # misc
    try:
        cap = int(pltpu.get_tpu_info().vmem_capacity_bytes)
    except Exception:
        cap = 128 * 1024 * 1024
    return int(min(max(need, 32 * 1024 * 1024), int(0.8 * cap)))


def multi_supcon_loss2(features, labels, temperature=0.07,
                       similarity_threshold=0.5, block_b=None):
    """JAX/Pallas equivalent of MultiSupConLoss2.forward.

    features: [B, V, *feat_dims] (any float dtype; cast to bf16 for the MXU,
              accumulation stays f32).  labels: [B, C] multi-hot.
    """
    if features.ndim < 3:
        raise ValueError("`features` should have at least 3 dimensions "
                         "[batch_size, n_views, feature_dim].")
    B, V = int(features.shape[0]), int(features.shape[1])
    feats = features.reshape(B, V, -1)                       # (B, V, D)
    if feats.dtype != jnp.bfloat16:
        feats = feats.astype(jnp.bfloat16)                   # halve the HBM stream
    D = int(feats.shape[-1])
    labels = jnp.asarray(labels, dtype=jnp.float32)
    C = int(labels.shape[1])

    # Lane-align the feature dim; then (B, V, Dp) -> (B, V*Dp) is a pure reshape
    # (no transpose copy): block (c, v) of the contrast spec addresses view v of
    # batch tile c directly, matching torch.cat(torch.unbind(f, 1), 0) order.
    D_pad = _round_up(D, 128)
    if D_pad != D:
        feats = jnp.pad(feats, ((0, 0), (0, 0), (0, D_pad - D)))
    feats2d = feats.reshape(B, V * D_pad)

    if block_b is None:
        block_b = _default_block_b()
    T = _round_up(min(int(block_b), _round_up(B, 8)), 8)
    B_pad = _round_up(B, T)
    if B_pad != B:
        feats2d = jnp.pad(feats2d, ((0, B_pad - B), (0, 0)))
        labels = jnp.pad(labels, ((0, B_pad - B), (0, 0)))

    n_bt = B_pad // T
    grid = (n_bt, n_bt, V)

    kernel = functools.partial(
        _multisupcon_kernel,
        batch_real=B, n_views=V, block_b=T,
        temperature=float(temperature), threshold=float(similarity_threshold),
        pad_cols=(B_pad != B))

    loss_rows, valid_rows = pl.pallas_call(
        kernel,
        out_shape=(jax.ShapeDtypeStruct((B_pad, 1), jnp.float32),
                   jax.ShapeDtypeStruct((B_pad, 1), jnp.float32)),
        grid_spec=pltpu.PrefetchScalarGridSpec(
            num_scalar_prefetch=0,
            grid=grid,
            in_specs=[
                # anchor rows = view 0 of the anchor-row tile
                pl.BlockSpec((T, D_pad), lambda i, c, v: (i, 0)),
                # contrast tile = view v of batch-column tile c
                pl.BlockSpec((T, D_pad), lambda i, c, v: (c, v)),
                # labels for anchor rows / contrast columns
                pl.BlockSpec((T, C), lambda i, c, v: (i, 0)),
                pl.BlockSpec((T, C), lambda i, c, v: (c, 0)),
            ],
            out_specs=[
                pl.BlockSpec((T, 1), lambda i, c, v: (i, 0)),
                pl.BlockSpec((T, 1), lambda i, c, v: (i, 0)),
            ],
            scratch_shapes=[
                pltpu.VMEM((T, T), jnp.bfloat16),  # label-similarity mask tile (0/1)
                pltpu.VMEM((T, 1), jnp.float32),   # running row max
                pltpu.VMEM((T, 1), jnp.float32),   # total exp sum
                pltpu.VMEM((T, 1), jnp.float32),   # positive exp sum
                pltpu.VMEM((T, 1), jnp.float32),   # positive-column count
            ]),
        compiler_params=pltpu.CompilerParams(
            dimension_semantics=("parallel", "arbitrary", "arbitrary"),
            vmem_limit_bytes=_vmem_limit_bytes(T, D_pad, C, 2)),
    )(feats2d, feats2d, labels, labels)

    count = jnp.sum(valid_rows)
    total = jnp.sum(loss_rows)
    return jnp.where(count > 0.0, total / jnp.maximum(count, 1.0), 0.0)


def _reference_loss(features, labels, temperature=0.07, threshold=0.5):
    """NumPy port of the exact PyTorch forward (loop + gathers) for verification."""
    f = np.asarray(features, dtype=np.float64)
    lab = np.asarray(labels, dtype=np.float64)
    B, V = f.shape[0], f.shape[1]
    f = f.reshape(B, V, -1)
    inter = lab @ lab.T
    s = lab.sum(axis=1, keepdims=True)
    union = s + s.T - inter
    sim = inter / (union + 1e-6)
    pmask = (sim >= threshold).astype(np.float64)
    nmask = (sim < threshold).astype(np.float64)
    contrast = np.concatenate([f[:, v, :] for v in range(V)], axis=0)
    dots = contrast @ contrast.T / temperature
    logits = dots - dots.max(axis=1, keepdims=True)
    N = B * V
    lm = 1.0 - np.eye(N)
    pm = np.tile(pmask, (V, V)) * lm
    nm = np.tile(nmask, (V, V)) * lm
    losses = []
    for i in range(B):
        pidx = np.where(pm[i] > 0)[0]
        nidx = np.where(nm[i] > 0)[0]
        if len(pidx) == 0:
            continue
        ps = np.exp(logits[i, pidx]).sum()
        ns = np.exp(logits[i, nidx]).sum()
        losses.append(-np.log(ps / (ps + ns + 1e-8)))
    return float(np.mean(losses)) if losses else 0.0


if __name__ == "__main__":
    key = jax.random.PRNGKey(0)
    kf, kl = jax.random.split(key)

    B, V, H, W = 4, 2, 4, 8      # features: [batch, n_views, 4, 8] -> D = 32
    C = 6                        # number of label classes (multi-hot)

    raw = jax.random.normal(kf, (B, V, H, W), dtype=jnp.float32)
    # L2-normalise each view (typical SupCon-style input) and round values to
    # bf16-representable f32 so the kernel's bf16 MXU path matches the reference.
    flat = raw.reshape(B, V, -1)
    flat = flat / jnp.linalg.norm(flat, axis=-1, keepdims=True)
    features = flat.reshape(B, V, H, W).astype(jnp.bfloat16).astype(jnp.float32)
    labels = jax.random.bernoulli(kl, 0.5, (B, C)).astype(jnp.float32)

    loss = multi_supcon_loss2(features, labels, temperature=0.07,
                              similarity_threshold=0.5)
    loss = jax.block_until_ready(loss)

    ref = _reference_loss(np.asarray(features), np.asarray(labels),
                          temperature=0.07, threshold=0.5)
    np.testing.assert_allclose(float(loss), ref, rtol=5e-4, atol=1e-5)

    print("KERNEL_OK")
</pallas_src>

<mosaic_0001>
module attributes {stable_mosaic.version = 11 : i64} {
  func.func @_multisupcon_kernel(%arg0: i32, %arg1: i32, %arg2: i32, %arg3: memref<8x128xbf16, #tpu.memory_space<vmem>>, %arg4: memref<8x128xbf16, #tpu.memory_space<vmem>>, %arg5: memref<8x6xf32, #tpu.memory_space<vmem>>, %arg6: memref<8x6xf32, #tpu.memory_space<vmem>>, %arg7: memref<8x1xf32, #tpu.memory_space<vmem>>, %arg8: memref<8x1xf32, #tpu.memory_space<vmem>>, %arg9: memref<8x8xbf16, #tpu.memory_space<vmem>>, %arg10: memref<8x1xf32, #tpu.memory_space<vmem>>, %arg11: memref<8x1xf32, #tpu.memory_space<vmem>>, %arg12: memref<8x1xf32, #tpu.memory_space<vmem>>, %arg13: memref<8x1xf32, #tpu.memory_space<vmem>>) attributes {dimension_semantics = [#tpu.dimension_semantics<parallel>, #tpu.dimension_semantics<arbitrary>, #tpu.dimension_semantics<arbitrary>], iteration_bounds = array<i64: 1, 1, 2>, scalar_prefetch = 0 : i64, scratch_operands = 5 : i64, tpu.core_type = #tpu.core_type<tc>, window_params = [{transform_indices = @transform_0, window_bounds = array<i64: 8, 128>}, {transform_indices = @transform_1, window_bounds = array<i64: 8, 128>}, {transform_indices = @transform_2, window_bounds = array<i64: 8, 6>}, {transform_indices = @transform_3, window_bounds = array<i64: 8, 6>}, {transform_indices = @transform_4, window_bounds = array<i64: 8, 1>}, {transform_indices = @transform_5, window_bounds = array<i64: 8, 1>}]} {
    %c0_i32 = arith.constant 0 : i32
    %0 = arith.cmpi eq, %arg1, %c0_i32 : i32
    %c0_i32_0 = arith.constant 0 : i32
    %1 = arith.cmpi eq, %arg2, %c0_i32_0 : i32
    %2 = arith.andi %0, %1 : i1
    %3 = arith.extui %2 : i1 to i32
    %c0_i32_1 = arith.constant 0 : i32
    %4 = arith.cmpi ne, %3, %c0_i32_1 : i32
    scf.if %4 {
      %cst_19 = arith.constant 0xFF800000 : f32
      %38 = vector.broadcast %cst_19 : f32 to vector<8x1xf32>
      %c0_20 = arith.constant 0 : index
      %c0_21 = arith.constant 0 : index
      %39 = vector.load %arg10[%c0_20, %c0_21] : memref<8x1xf32, #tpu.memory_space<vmem>>, vector<8x1xf32>
      tpu.vector_store %arg10[%c0_20, %c0_21], %38 {strides = array<i32>} : memref<8x1xf32, #tpu.memory_space<vmem>>, vector<8x1xf32>,
      %cst_22 = arith.constant 0.000000e+00 : f32
      %40 = vector.broadcast %cst_22 : f32 to vector<8x1xf32>
      %c0_23 = arith.constant 0 : index
      %c0_24 = arith.constant 0 : index
      %41 = vector.load %arg11[%c0_23, %c0_24] : memref<8x1xf32, #tpu.memory_space<vmem>>, vector<8x1xf32>
      tpu.vector_store %arg11[%c0_23, %c0_24], %40 {strides = array<i32>} : memref<8x1xf32, #tpu.memory_space<vmem>>, vector<8x1xf32>,
      %cst_25 = arith.constant 0.000000e+00 : f32
      %42 = vector.broadcast %cst_25 : f32 to vector<8x1xf32>
      %c0_26 = arith.constant 0 : index
      %c0_27 = arith.constant 0 : index
      %43 = vector.load %arg12[%c0_26, %c0_27] : memref<8x1xf32, #tpu.memory_space<vmem>>, vector<8x1xf32>
      tpu.vector_store %arg12[%c0_26, %c0_27], %42 {strides = array<i32>} : memref<8x1xf32, #tpu.memory_space<vmem>>, vector<8x1xf32>,
      %cst_28 = arith.constant 0.000000e+00 : f32
      %44 = vector.broadcast %cst_28 : f32 to vector<8x1xf32>
      %c0_29 = arith.constant 0 : index
      %c0_30 = arith.constant 0 : index
      %45 = vector.load %arg13[%c0_29, %c0_30] : memref<8x1xf32, #tpu.memory_space<vmem>>, vector<8x1xf32>
      tpu.vector_store %arg13[%c0_29, %c0_30], %44 {strides = array<i32>} : memref<8x1xf32, #tpu.memory_space<vmem>>, vector<8x1xf32>,
    } else {
    }
    %c0_i32_2 = arith.constant 0 : i32
    %5 = arith.cmpi eq, %arg2, %c0_i32_2 : i32
    %6 = arith.extui %5 : i1 to i32
    %c0_i32_3 = arith.constant 0 : i32
    %7 = arith.cmpi ne, %6, %c0_i32_3 : i32
    scf.if %7 {
      %c0_19 = arith.constant 0 : index
      %c0_20 = arith.constant 0 : index
      %38 = vector.load %arg5[%c0_19, %c0_20] : memref<8x6xf32, #tpu.memory_space<vmem>>, vector<8x6xf32>
      %c0_21 = arith.constant 0 : index
      %c0_22 = arith.constant 0 : index
      %39 = vector.load %arg6[%c0_21, %c0_22] : memref<8x6xf32, #tpu.memory_space<vmem>>, vector<8x6xf32>
      %cst_23 = arith.constant dense<0.000000e+00> : vector<8x8xf32>
      %40 = tpu.matmul %38, %39, %cst_23 {dimension_numbers = #tpu.dot_dimension_numbers<[1], [1], [0], [0], [0, 0, 1, 0], [], []>} : vector<8x6xf32>, vector<8x6xf32>, vector<8x8xf32> -> vector<8x8xf32>
      %cst_24 = arith.constant dense<0.000000e+00> : vector<8xf32>
      %41 = vector.multi_reduction <add>, %38, %cst_24 [1] : vector<8x6xf32> to vector<8xf32>
      %42 = vector.shape_cast %41 : vector<8xf32> to vector<8x1xf32>
      %cst_25 = arith.constant dense<0.000000e+00> : vector<8xf32>
      %43 = vector.multi_reduction <add>, %39, %cst_25 [1] : vector<8x6xf32> to vector<8xf32>
      %44 = vector.shape_cast %43 : vector<8xf32> to vector<8x1xf32>
      %45 = tpu.transpose %44, [1, 0] : vector<8x1xf32> -> vector<1x8xf32>
      %46 = vector.broadcast %42 : vector<8x1xf32> to vector<8x8xf32>
      %47 = vector.broadcast %45 : vector<1x8xf32> to vector<8x8xf32>
      %48 = arith.addf %46, %47 : vector<8x8xf32>
      %49 = arith.subf %48, %40 : vector<8x8xf32>
      %cst_26 = arith.constant 9.99999997E-7 : f32
      %50 = vector.broadcast %cst_26 : f32 to vector<8x8xf32>
      %51 = arith.addf %49, %50 : vector<8x8xf32>
      %52 = arith.divf %40, %51 : vector<8x8xf32>
      %cst_27 = arith.constant 5.000000e-01 : f32
      %53 = vector.broadcast %cst_27 : f32 to vector<8x8xf32>
      %54 = arith.cmpf oge, %52, %53 : vector<8x8xf32>
      %55 = arith.extui %54 : vector<8x8xi1> to vector<8x8xi32>
      %56 = arith.sitofp %55 : vector<8x8xi32> to vector<8x8xf32>
      %c8_i32 = arith.constant 8 : i32
      %57 = arith.muli %arg1, %c8_i32 : i32
      %58 = tpu.iota {dimensions = array<i32: 1>} : vector<1x8xi32>
      %59 = vector.broadcast %57 : i32 to vector<1x8xi32>
      %60 = arith.addi %59, %58 : vector<1x8xi32>
      %c4_i32 = arith.constant 4 : i32
      %61 = vector.broadcast %c4_i32 : i32 to vector<1x8xi32>
      %62 = arith.cmpi slt, %60, %61 : vector<1x8xi32>
      %cst_28 = arith.constant 0.000000e+00 : f32
      %63 = vector.shape_cast %62 : vector<1x8xi1> to vector<1x8xi1>
      %64 = vector.broadcast %63 : vector<1x8xi1> to vector<8x8xi1>
      %65 = vector.broadcast %cst_28 : f32 to vector<8x8xf32>
      %66 = arith.select %64, %56, %65 : vector<8x8xi1>, vector<8x8xf32>
      %c0_29 = arith.constant 0 : index
      %c0_30 = arith.constant 0 : index
      %67 = vector.load %arg13[%c0_29, %c0_30] : memref<8x1xf32, #tpu.memory_space<vmem>>, vector<8x1xf32>
      %cst_31 = arith.constant dense<0.000000e+00> : vector<8xf32>
      %68 = vector.multi_reduction <add>, %66, %cst_31 [1] : vector<8x8xf32> to vector<8xf32>
      %69 = vector.shape_cast %68 : vector<8xf32> to vector<8x1xf32>
      %70 = arith.addf %67, %69 : vector<8x1xf32>
      %c0_32 = arith.constant 0 : index
      %c0_33 = arith.constant 0 : index
      %71 = vector.load %arg13[%c0_32, %c0_33] : memref<8x1xf32, #tpu.memory_space<vmem>>, vector<8x1xf32>
      tpu.vector_store %arg13[%c0_32, %c0_33], %70 {strides = array<i32>} : memref<8x1xf32, #tpu.memory_space<vmem>>, vector<8x1xf32>,
      %72 = arith.truncf %66 : vector<8x8xf32> to vector<8x8xbf16>
      %c0_34 = arith.constant 0 : index
      %c0_35 = arith.constant 0 : index
      %73 = vector.load %arg9[%c0_34, %c0_35] : memref<8x8xbf16, #tpu.memory_space<vmem>>, vector<8x8xbf16>
      tpu.vector_store %arg9[%c0_34, %c0_35], %72 {strides = array<i32>} : memref<8x8xbf16, #tpu.memory_space<vmem>>, vector<8x8xbf16>,
    } else {
    }
    %c0 = arith.constant 0 : index
    %c0_4 = arith.constant 0 : index
    %8 = vector.load %arg3[%c0, %c0_4] : memref<8x128xbf16, #tpu.memory_space<vmem>>, vector<8x128xbf16>
    %c0_5 = arith.constant 0 : index
    %c0_6 = arith.constant 0 : index
    %9 = vector.load %arg4[%c0_5, %c0_6] : memref<8x128xbf16, #tpu.memory_space<vmem>>, vector<8x128xbf16>
    %cst = arith.constant dense<0.000000e+00> : vector<8x8xf32>
    %10 = tpu.matmul %8, %9, %cst {dimension_numbers = #tpu.dot_dimension_numbers<[1], [1], [0], [0], [0, 0, 1, 0], [], []>} : vector<8x128xbf16>, vector<8x128xbf16>, vector<8x8xf32> -> vector<8x8xf32>
    %cst_7 = arith.constant 14.2857141 : f32
    %11 = vector.broadcast %cst_7 : f32 to vector<8x8xf32>
    %12 = arith.mulf %10, %11 : vector<8x8xf32>
    %c0_8 = arith.constant 0 : index
    %c0_9 = arith.constant 0 : index
    %13 = vector.load %arg10[%c0_8, %c0_9] : memref<8x1xf32, #tpu.memory_space<vmem>>, vector<8x1xf32>
    %cst_10 = arith.constant dense<0xFF800000> : vector<8xf32>
    %14 = vector.multi_reduction <maximumf>, %12, %cst_10 [1] : vector<8x8xf32> to vector<8xf32>
    %15 = vector.shape_cast %14 : vector<8xf32> to vector<8x1xf32>
    %16 = arith.maximumf %13, %15 : vector<8x1xf32>
    %17 = arith.subf %13, %16 : vector<8x1xf32>
    %18 = math.exp %17 : vector<8x1xf32>
    %19 = vector.broadcast %16 : vector<8x1xf32> to vector<8x8xf32>
    %20 = arith.subf %12, %19 : vector<8x8xf32>
    %21 = math.exp %20 : vector<8x8xf32>
    %c0_11 = arith.constant 0 : index
    %c0_12 = arith.constant 0 : index
    %22 = vector.load %arg10[%c0_11, %c0_12] : memref<8x1xf32, #tpu.memory_space<vmem>>, vector<8x1xf32>
    tpu.vector_store %arg10[%c0_11, %c0_12], %16 {strides = array<i32>} : memref<8x1xf32, #tpu.memory_space<vmem>>, vector<8x1xf32>,
    %23 = arith.cmpi eq, %arg0, %arg1 : i32
    %c0_i32_13 = arith.constant 0 : i32
    %24 = arith.cmpi eq, %arg2, %c0_i32_13 : i32
    %25 = arith.andi %23, %24 : i1
    %c0_i32_14 = arith.constant 0 : i32
    %26 = arith.cmpi eq, %arg1, %c0_i32_14 : i32
    %27 = arith.ori %25, %26 : i1
    %true = arith.constant true
    %28 = arith.xori %27, %true : i1
    %29 = arith.extui %28 : i1 to i32
    %c0_i32_15 = arith.constant 0 : i32
    %30 = arith.cmpi ne, %29, %c0_i32_15 : i32
    scf.if %30 {
      %c0_19 = arith.constant 0 : index
      %c0_20 = arith.constant 0 : index
      %38 = vector.load %arg11[%c0_19, %c0_20] : memref<8x1xf32, #tpu.memory_space<vmem>>, vector<8x1xf32>
      %39 = arith.mulf %18, %38 : vector<8x1xf32>
      %cst_21 = arith.constant dense<0.000000e+00> : vector<8xf32>
      %40 = vector.multi_reduction <add>, %21, %cst_21 [1] : vector<8x8xf32> to vector<8xf32>
      %41 = vector.shape_cast %40 : vector<8xf32> to vector<8x1xf32>
      %42 = arith.addf %39, %41 : vector<8x1xf32>
      %c0_22 = arith.constant 0 : index
      %c0_23 = arith.constant 0 : index
      %43 = vector.load %arg11[%c0_22, %c0_23] : memref<8x1xf32, #tpu.memory_space<vmem>>, vector<8x1xf32>
      tpu.vector_store %arg11[%c0_22, %c0_23], %42 {strides = array<i32>} : memref<8x1xf32, #tpu.memory_space<vmem>>, vector<8x1xf32>,
      %c0_24 = arith.constant 0 : index
      %c0_25 = arith.constant 0 : index
      %44 = vector.load %arg12[%c0_24, %c0_25] : memref<8x1xf32, #tpu.memory_space<vmem>>, vector<8x1xf32>
      %45 = arith.mulf %18, %44 : vector<8x1xf32>
      %c0_26 = arith.constant 0 : index
      %c0_27 = arith.constant 0 : index
      %46 = vector.load %arg9[%c0_26, %c0_27] : memref<8x8xbf16, #tpu.memory_space<vmem>>, vector<8x8xbf16>
      %47 = arith.extf %46 : vector<8x8xbf16> to vector<8x8xf32>
      %48 = arith.mulf %47, %21 : vector<8x8xf32>
      %cst_28 = arith.constant dense<0.000000e+00> : vector<8xf32>
      %49 = vector.multi_reduction <add>, %48, %cst_28 [1] : vector<8x8xf32> to vector<8xf32>
      %50 = vector.shape_cast %49 : vector<8xf32> to vector<8x1xf32>
      %51 = arith.addf %45, %50 : vector<8x1xf32>
      %c0_29 = arith.constant 0 : index
      %c0_30 = arith.constant 0 : index
      %52 = vector.load %arg12[%c0_29, %c0_30] : memref<8x1xf32, #tpu.memory_space<vmem>>, vector<8x1xf32>
      tpu.vector_store %arg12[%c0_29, %c0_30], %51 {strides = array<i32>} : memref<8x1xf32, #tpu.memory_space<vmem>>, vector<8x1xf32>,
    } else {
    }
    %31 = arith.extui %27 : i1 to i32
    %c0_i32_16 = arith.constant 0 : i32
    %32 = arith.cmpi ne, %31, %c0_i32_16 : i32
    scf.if %32 {
      %c8_i32 = arith.constant 8 : i32
      %38 = arith.muli %arg0, %c8_i32 : i32
      %39 = tpu.iota {dimensions = array<i32: 0>} : vector<8x1xi32>
      %40 = vector.broadcast %38 : i32 to vector<8x1xi32>
      %41 = arith.addi %40, %39 : vector<8x1xi32>
      %c8_i32_19 = arith.constant 8 : i32
      %42 = arith.muli %arg1, %c8_i32_19 : i32
      %43 = tpu.iota {dimensions = array<i32: 1>} : vector<1x8xi32>
      %44 = vector.broadcast %42 : i32 to vector<1x8xi32>
      %45 = arith.addi %44, %43 : vector<1x8xi32>
      %46 = vector.broadcast %41 : vector<8x1xi32> to vector<8x8xi32>
      %47 = vector.broadcast %45 : vector<1x8xi32> to vector<8x8xi32>
      %48 = arith.cmpi eq, %46, %47 : vector<8x8xi32>
      %c0_i32_20 = arith.constant 0 : i32
      %49 = arith.cmpi eq, %arg2, %c0_i32_20 : i32
      %50 = vector.broadcast %49 : i1 to vector<8x8xi1>
      %51 = arith.andi %48, %50 : vector<8x8xi1>
      %cst_21 = arith.constant dense<true> : vector<8x8xi1>
      %52 = arith.xori %51, %cst_21 : vector<8x8xi1>
      %c4_i32 = arith.constant 4 : i32
      %53 = vector.broadcast %c4_i32 : i32 to vector<1x8xi32>
      %54 = arith.cmpi slt, %45, %53 : vector<1x8xi32>
      %55 = vector.broadcast %54 : vector<1x8xi1> to vector<8x8xi1>
      %56 = arith.andi %52, %55 : vector<8x8xi1>
      %cst_22 = arith.constant 0.000000e+00 : f32
      %57 = vector.broadcast %cst_22 : f32 to vector<8x8xf32>
      %58 = arith.select %56, %21, %57 : vector<8x8xi1>, vector<8x8xf32>
      %c0_23 = arith.constant 0 : index
      %c0_24 = arith.constant 0 : index
      %59 = vector.load %arg11[%c0_23, %c0_24] : memref<8x1xf32, #tpu.memory_space<vmem>>, vector<8x1xf32>
      %60 = arith.mulf %18, %59 : vector<8x1xf32>
      %cst_25 = arith.constant dense<0.000000e+00> : vector<8xf32>
      %61 = vector.multi_reduction <add>, %58, %cst_25 [1] : vector<8x8xf32> to vector<8xf32>
      %62 = vector.shape_cast %61 : vector<8xf32> to vector<8x1xf32>
      %63 = arith.addf %60, %62 : vector<8x1xf32>
      %c0_26 = arith.constant 0 : index
      %c0_27 = arith.constant 0 : index
      %64 = vector.load %arg11[%c0_26, %c0_27] : memref<8x1xf32, #tpu.memory_space<vmem>>, vector<8x1xf32>
      tpu.vector_store %arg11[%c0_26, %c0_27], %63 {strides = array<i32>} : memref<8x1xf32, #tpu.memory_space<vmem>>, vector<8x1xf32>,
      %c0_28 = arith.constant 0 : index
      %c0_29 = arith.constant 0 : index
      %65 = vector.load %arg12[%c0_28, %c0_29] : memref<8x1xf32, #tpu.memory_space<vmem>>, vector<8x1xf32>
      %66 = arith.mulf %18, %65 : vector<8x1xf32>
      %c0_30 = arith.constant 0 : index
      %c0_31 = arith.constant 0 : index
      %67 = vector.load %arg9[%c0_30, %c0_31] : memref<8x8xbf16, #tpu.memory_space<vmem>>, vector<8x8xbf16>
      %68 = arith.extf %67 : vector<8x8xbf16> to vector<8x8xf32>
      %69 = arith.mulf %68, %58 : vector<8x8xf32>
      %cst_32 = arith.constant dense<0.000000e+00> : vector<8xf32>
      %70 = vector.multi_reduction <add>, %69, %cst_32 [1] : vector<8x8xf32> to vector<8xf32>
      %71 = vector.shape_cast %70 : vector<8xf32> to vector<8x1xf32>
      %72 = arith.addf %66, %71 : vector<8x1xf32>
      %c0_33 = arith.constant 0 : index
      %c0_34 = arith.constant 0 : index
      %73 = vector.load %arg12[%c0_33, %c0_34] : memref<8x1xf32, #tpu.memory_space<vmem>>, vector<8x1xf32>
      tpu.vector_store %arg12[%c0_33, %c0_34], %72 {strides = array<i32>} : memref<8x1xf32, #tpu.memory_space<vmem>>, vector<8x1xf32>,
    } else {
    }
    %c0_i32_17 = arith.constant 0 : i32
    %33 = arith.cmpi eq, %arg1, %c0_i32_17 : i32
    %c1_i32 = arith.constant 1 : i32
    %34 = arith.cmpi eq, %arg2, %c1_i32 : i32
    %35 = arith.andi %33, %34 : i1
    %36 = arith.extui %35 : i1 to i32
    %c0_i32_18 = arith.constant 0 : i32
    %37 = arith.cmpi ne, %36, %c0_i32_18 : i32
    scf.if %37 {
      %c0_19 = arith.constant 0 : index
      %c0_20 = arith.constant 0 : index
      %38 = vector.load %arg5[%c0_19, %c0_20] : memref<8x6xf32, #tpu.memory_space<vmem>>, vector<8x6xf32>
      %cst_21 = arith.constant dense<0.000000e+00> : vector<8xf32>
      %39 = vector.multi_reduction <add>, %38, %cst_21 [1] : vector<8x6xf32> to vector<8xf32>
      %40 = vector.shape_cast %39 : vector<8xf32> to vector<8x1xf32>
      %41 = arith.mulf %38, %38 : vector<8x6xf32>
      %cst_22 = arith.constant dense<0.000000e+00> : vector<8xf32>
      %42 = vector.multi_reduction <add>, %41, %cst_22 [1] : vector<8x6xf32> to vector<8xf32>
      %43 = vector.shape_cast %42 : vector<8xf32> to vector<8x1xf32>
      %cst_23 = arith.constant 2.000000e+00 : f32
      %44 = vector.broadcast %cst_23 : f32 to vector<8x1xf32>
      %45 = arith.mulf %44, %40 : vector<8x1xf32>
      %46 = arith.subf %45, %43 : vector<8x1xf32>
      %cst_24 = arith.constant 9.99999997E-7 : f32
      %47 = vector.broadcast %cst_24 : f32 to vector<8x1xf32>
      %48 = arith.addf %46, %47 : vector<8x1xf32>
      %49 = arith.divf %43, %48 : vector<8x1xf32>
      %cst_25 = arith.constant 5.000000e-01 : f32
      %50 = vector.broadcast %cst_25 : f32 to vector<8x1xf32>
      %51 = arith.cmpf oge, %49, %50 : vector<8x1xf32>
      %52 = arith.extui %51 : vector<8x1xi1> to vector<8x1xi32>
      %53 = arith.sitofp %52 : vector<8x1xi32> to vector<8x1xf32>
      %c0_26 = arith.constant 0 : index
      %c0_27 = arith.constant 0 : index
      %54 = vector.load %arg13[%c0_26, %c0_27] : memref<8x1xf32, #tpu.memory_space<vmem>>, vector<8x1xf32>
      %cst_28 = arith.constant 2.000000e+00 : f32
      %55 = vector.broadcast %cst_28 : f32 to vector<8x1xf32>
      %56 = arith.mulf %55, %54 : vector<8x1xf32>
      %57 = arith.subf %56, %53 : vector<8x1xf32>
      %c8_i32 = arith.constant 8 : i32
      %58 = arith.muli %arg0, %c8_i32 : i32
      %59 = tpu.iota {dimensions = array<i32: 0>} : vector<8x1xi32>
      %60 = vector.broadcast %58 : i32 to vector<8x1xi32>
      %61 = arith.addi %60, %59 : vector<8x1xi32>
      %cst_29 = arith.constant 0.000000e+00 : f32
      %62 = vector.broadcast %cst_29 : f32 to vector<8x1xf32>
      %63 = arith.cmpf ogt, %57, %62 : vector<8x1xf32>
      %c4_i32 = arith.constant 4 : i32
      %64 = vector.broadcast %c4_i32 : i32 to vector<8x1xi32>
      %65 = arith.cmpi slt, %61, %64 : vector<8x1xi32>
      %66 = arith.andi %63, %65 : vector<8x1xi1>
      %c0_30 = arith.constant 0 : index
      %c0_31 = arith.constant 0 : index
      %67 = vector.load %arg12[%c0_30, %c0_31] : memref<8x1xf32, #tpu.memory_space<vmem>>, vector<8x1xf32>
      %c0_32 = arith.constant 0 : index
      %c0_33 = arith.constant 0 : index
      %68 = vector.load %arg11[%c0_32, %c0_33] : memref<8x1xf32, #tpu.memory_space<vmem>>, vector<8x1xf32>
      %cst_34 = arith.constant 9.99999993E-9 : f32
      %69 = vector.broadcast %cst_34 : f32 to vector<8x1xf32>
      %70 = arith.addf %68, %69 : vector<8x1xf32>
      %71 = arith.divf %67, %70 : vector<8x1xf32>
      %72 = math.log %71 : vector<8x1xf32>
      %cst_35 = arith.constant 0.000000e+00 : f32
      %73 = vector.broadcast %cst_35 : f32 to vector<8x1xf32>
      %74 = arith.subf %73, %72 : vector<8x1xf32>
      %cst_36 = arith.constant 0.000000e+00 : f32
      %75 = vector.broadcast %cst_36 : f32 to vector<8x1xf32>
      %76 = arith.select %66, %74, %75 : vector<8x1xi1>, vector<8x1xf32>
      %c0_37 = arith.constant 0 : index
      %c0_38 = arith.constant 0 : index
      %77 = vector.load %arg7[%c0_37, %c0_38] : memref<8x1xf32, #tpu.memory_space<vmem>>, vector<8x1xf32>
      tpu.vector_store %arg7[%c0_37, %c0_38], %76 {strides = array<i32>} : memref<8x1xf32, #tpu.memory_space<vmem>>, vector<8x1xf32>,
      %78 = arith.extui %66 : vector<8x1xi1> to vector<8x1xi32>
      %79 = arith.sitofp %78 : vector<8x1xi32> to vector<8x1xf32>
      %c0_39 = arith.constant 0 : index
      %c0_40 = arith.constant 0 : index
      %80 = vector.load %arg8[%c0_39, %c0_40] : memref<8x1xf32, #tpu.memory_space<vmem>>, vector<8x1xf32>
      tpu.vector_store %arg8[%c0_39, %c0_40], %79 {strides = array<i32>} : memref<8x1xf32, #tpu.memory_space<vmem>>, vector<8x1xf32>,
    } else {
    }
    return
  }
  func.func @transform_0(%arg0: i32, %arg1: i32, %arg2: i32) -> (i32, i32) {
    %c0_i32 = arith.constant 0 : i32
    %c0_i32_0 = arith.constant 0 : i32
    return %arg0, %c0_i32 : i32, i32
  }
  func.func @transform_1(%arg0: i32, %arg1: i32, %arg2: i32) -> (i32, i32) {
    %c0_i32 = arith.constant 0 : i32
    return %arg1, %arg2 : i32, i32
  }
  func.func @transform_2(%arg0: i32, %arg1: i32, %arg2: i32) -> (i32, i32) {
    %c0_i32 = arith.constant 0 : i32
    %c0_i32_0 = arith.constant 0 : i32
    return %arg0, %c0_i32 : i32, i32
  }
  func.func @transform_3(%arg0: i32, %arg1: i32, %arg2: i32) -> (i32, i32) {
    %c0_i32 = arith.constant 0 : i32
    %c0_i32_0 = arith.constant 0 : i32
    return %arg1, %c0_i32 : i32, i32
  }
  func.func @transform_4(%arg0: i32, %arg1: i32, %arg2: i32) -> (i32, i32) {
    %c0_i32 = arith.constant 0 : i32
    %c0_i32_0 = arith.constant 0 : i32
    return %arg0, %c0_i32 : i32, i32
  }
  func.func @transform_5(%arg0: i32, %arg1: i32, %arg2: i32) -> (i32, i32) {
    %c0_i32 = arith.constant 0 : i32
    %c0_i32_0 = arith.constant 0 : i32
    return %arg0, %c0_i32 : i32, i32
  }
}

</mosaic_0001>

<llo_original>
// kernel: tpu_custom_call.1
$region0: #{tpu_custom_call.1}
  #allocation0 [shape = 'u32[]', space=smem, size = 0x4, offset = 0x4, fixed_abs, tag = 'smem constant byte address 0x4 - core index']
  #allocation1 [shape = 'u32[144,128]{1,0:T(1,128)}', space=vmem, size = 0x12000, scoped, tag = 'internal scratch']
  #allocation2 [shape = 'bf16[8,8]{1,0:T(8,128)(2,1)}', space=vmem, size = 0x800, scoped, tag = 'scratch operand']
  #allocation3 [shape = 'f32[8,1]{1,0:T(8,128)}', space=vmem, size = 0x1000, scoped, tag = 'scratch operand']
  #allocation4 [shape = 'f32[8,1]{1,0:T(8,128)}', space=vmem, size = 0x1000, scoped, tag = 'scratch operand']
  #allocation5 [shape = 'f32[8,1]{1,0:T(8,128)}', space=vmem, size = 0x1000, scoped, tag = 'scratch operand']
  #allocation6 [shape = 'f32[8,1]{1,0:T(8,128)}', space=vmem, size = 0x1000, scoped, tag = 'scratch operand']
  %s0 = inlined_call_operand.hbm [shape: bf16[8,256], index: 0, kind: input, shape index: {}]
  %s1 = inlined_call_operand.hbm [shape: bf16[8,256], index: 1, kind: input, shape index: {}]
  %s2 = inlined_call_operand.hbm [shape: f32[8,6], index: 2, kind: input, shape index: {}]
  %s3 = inlined_call_operand.hbm [shape: f32[8,6], index: 3, kind: input, shape index: {}]
  %s4 = inlined_call_operand.vmem [shape: f32[8,1], index: 4, kind: output, shape index: {0}]
  %s5 = inlined_call_operand.vmem [shape: f32[8,1], index: 5, kind: output, shape index: {1}]
  %6 = xla_tuple %s4, %s5
  %s7 = sld [smem:[#allocation0]]
  $region93: #{tpu_custom_call.1} parent=0
    _
  %s9 = ssub.s32 1, %s7
  %s10 = scalar_select 0, %s9, %s7
  $region1: #{tpu_custom_call.1} parent=0
    #allocation7 [shape = 'u8[2048]{0}', space=vmem, size = 0x800, scoped, tag = 'input window, operand 0, single buffered']
    #allocation8 [shape = 's32[2]{0}', space=sflag, size = 0x8, scoped, tag = 'scoped memory for tpu_custom_call.1']
    #allocation9 [shape = 'u8[4096]{0}', space=vmem, size = 0x1000, scoped, tag = 'input window, operand 1']
    #allocation10 [shape = 's32[2]{0}', space=sflag, size = 0x8, scoped, tag = 'scoped memory for tpu_custom_call.1']
    #allocation11 [shape = 'u8[4096]{0}', space=vmem, size = 0x1000, scoped, tag = 'input window, operand 2, single buffered']
    #allocation12 [shape = 'u8[4096]{0}', space=vmem, size = 0x1000, scoped, tag = 'input window, operand 3, single buffered']
    #allocation13 [shape = 's32[1]{0}', space=sflag, size = 0x4, scoped, tag = 'scoped memory for tpu_custom_call.1']
    %11 = vsyncpa [#allocation8], 0
    %12 = vsyncpa [#allocation10], 0
    %s13 = scalar_lea.sflag [#allocation10], 1
    %14 = vsyncpa %s13, 0
    %15 = vsyncpa [#allocation13], 0
    loop: start=0, step=1, limit=4
    $region2: #{tpu_custom_call.1} parent=1 // loop_pre_header
      _
    $region3: #{tpu_custom_call.1} parent=1 // loop_header
      %s17 = sphi 0, %s21
      %p18 = scmp.ge.s32.totalorder %s17, 4
      %s24 = sphi 0, %s43
      %s25 = sphi 0, %s39
      %s26 = sphi 0, %s35
      %s27 = sphi 0, %s24
      %s28 = sphi 0, %s25
      %s29 = sphi 0, %s26
      %s30 = sphi 0, %s27
      %s31 = sphi 0, %s28
      %s32 = sphi 0, %s29
      %s46 = sphi 0, %s48
      %s49 = sphi 0, %s46
      %s50 = sphi 0, %s49
      %s66 = sphi 0, %s50
      %s74 = sphi 0, %s76
      %s77 = sphi 0, %s74
      %s78 = sphi 0, %s77
      %s94 = sphi 0, %s78
      %s100 = sphi 0, %s102
      %s103 = sphi 0, %s100
      %s104 = sphi 0, %s103
      %s120 = sphi 0, %s104
      %s126 = sphi 0, %s128
      %s129 = sphi 0, %s126
      %s130 = sphi 0, %s129
      %s146 = sphi 0, %s130
      %s152 = sphi 0, %s154
      %s155 = sphi 0, %s152
      %s156 = sphi 0, %s155
      %s172 = sphi 0, %s156
      %s178 = sphi 0, %s180
      %s181 = sphi 0, %s178
      %s182 = sphi 0, %s181
      %s198 = sphi 0, %s182
    $region4: #{tpu_custom_call.1} parent=1 // loop_header_branch
      %20 = sbr.rel (%p18) target = $region8
    $region5: #{tpu_custom_call.1} parent=1 // loop_body
      %s22 = ssub.s32 %s17, 1
      %s23 = ssub.s32 %s17, 2
      %s33 = sadd.s32 1, %s26
      %p34 = scmp.ge.s32.totalorder %s33, 2
      %s35 = scalar_select %p34, 0, %s33
      %s36 = sadd.s32 1, %s25
      %s37 = scalar_select %p34, %s36, %s25
      %p38 = scmp.ge.s32.totalorder %s37, 1
      %s39 = scalar_select %p38, 0, %s37
      %s40 = sadd.s32 1, %s24
      %s41 = scalar_select %p38, %s40, %s24
      %p42 = scmp.ge.s32.totalorder %s41, 1
      %s43 = scalar_select %p42, 0, %s41
      %s44 = ssub.s32 %s24, %s43
      %p45 = scmp.eq.s32.totalorder %s44, 0
      %s47 = sadd.s32 %s46, 1
      %s48 = scalar_select %p45, %s46, %s47
      %p51 = pneg %p45
      %p52 = scmp.eq.s32.totalorder %s17, 1
      %p53 = por %p51, %p52
      %p54 = scmp.ne.s32.totalorder %s46, %s49
      %p55 = scmp.eq.s32.totalorder %s17, 0
      %p56 = por %p54, %p55
      %p57 = scmp.ne.s32.totalorder %s46, %s49
      %p58 = scmp.eq.s32.totalorder %s22, 1
      %p59 = por %p57, %p58
      %p60 = scmp.ne.s32.totalorder %s49, %s50
      %p61 = scmp.eq.s32.totalorder %s22, 0
      %p62 = por %p60, %p61
      %p63 = scmp.ne.s32.totalorder %s49, %s50
      %p64 = scmp.eq.s32.totalorder %s23, 1
      %p65 = por %p63, %p64
      %p67 = scmp.ne.s32.totalorder %s50, %s66
      %p68 = scmp.eq.s32.totalorder %s23, 0
      %p69 = por %p67, %p68
      %s70 = ssub.s32 %s25, %s39
      %s71 = ssub.s32 %s26, %s35
      %s72 = sor.u32 %s70, %s71
      %p73 = scmp.eq.s32.totalorder %s72, 0
      %s75 = sadd.s32 %s74, 1
      %s76 = scalar_select %p73, %s74, %s75
      %p79 = pneg %p73
      %p80 = scmp.eq.s32.totalorder %s17, 1
      %p81 = por %p79, %p80
      %p82 = scmp.ne.s32.totalorder %s74, %s77
      %p83 = scmp.eq.s32.totalorder %s17, 0
      %p84 = por %p82, %p83
      %p85 = scmp.ne.s32.totalorder %s74, %s77
      %p86 = scmp.eq.s32.totalorder %s22, 1
      %p87 = por %p85, %p86
      %p88 = scmp.ne.s32.totalorder %s77, %s78
      %p89 = scmp.eq.s32.totalorder %s22, 0
      %p90 = por %p88, %p89
      %p91 = scmp.ne.s32.totalorder %s77, %s78
      %p92 = scmp.eq.s32.totalorder %s23, 1
      %p93 = por %p91, %p92
      %p95 = scmp.ne.s32.totalorder %s78, %s94
      %p96 = scmp.eq.s32.totalorder %s23, 0
      %p97 = por %p95, %p96
      %s98 = ssub.s32 %s24, %s43
      %p99 = scmp.eq.s32.totalorder %s98, 0
      %s101 = sadd.s32 %s100, 1
      %s102 = scalar_select %p99, %s100, %s101
      %p105 = pneg %p99
      %p106 = scmp.eq.s32.totalorder %s17, 1
      %p107 = por %p105, %p106
      %p108 = scmp.ne.s32.totalorder %s100, %s103
      %p109 = scmp.eq.s32.totalorder %s17, 0
      %p110 = por %p108, %p109
      %p111 = scmp.ne.s32.totalorder %s100, %s103
      %p112 = scmp.eq.s32.totalorder %s22, 1
      %p113 = por %p111, %p112
      %p114 = scmp.ne.s32.totalorder %s103, %s104
      %p115 = scmp.eq.s32.totalorder %s22, 0
      %p116 = por %p114, %p115
      %p117 = scmp.ne.s32.totalorder %s103, %s104
      %p118 = scmp.eq.s32.totalorder %s23, 1
      %p119 = por %p117, %p118
      %p121 = scmp.ne.s32.totalorder %s104, %s120
      %p122 = scmp.eq.s32.totalorder %s23, 0
      %p123 = por %p121, %p122
      %s124 = ssub.s32 %s25, %s39
      %p125 = scmp.eq.s32.totalorder %s124, 0
      %s127 = sadd.s32 %s126, 1
      %s128 = scalar_select %p125, %s126, %s127
      %p131 = pneg %p125
      %p132 = scmp.eq.s32.totalorder %s17, 1
      %p133 = por %p131, %p132
      %p134 = scmp.ne.s32.totalorder %s126, %s129
      %p135 = scmp.eq.s32.totalorder %s17, 0
      %p136 = por %p134, %p135
      %p137 = scmp.ne.s32.totalorder %s126, %s129
      %p138 = scmp.eq.s32.totalorder %s22, 1
      %p139 = por %p137, %p138
      %p140 = scmp.ne.s32.totalorder %s129, %s130
      %p141 = scmp.eq.s32.totalorder %s22, 0
      %p142 = por %p140, %p141
      %p143 = scmp.ne.s32.totalorder %s129, %s130
      %p144 = scmp.eq.s32.totalorder %s23, 1
      %p145 = por %p143, %p144
      %p147 = scmp.ne.s32.totalorder %s130, %s146
      %p148 = scmp.eq.s32.totalorder %s23, 0
      %p149 = por %p147, %p148
      %s150 = ssub.s32 %s24, %s43
      %p151 = scmp.eq.s32.totalorder %s150, 0
      %s153 = sadd.s32 %s152, 1
      %s154 = scalar_select %p151, %s152, %s153
      %p157 = pneg %p151
      %p158 = scmp.eq.s32.totalorder %s17, 1
      %p159 = por %p157, %p158
      %p160 = scmp.ne.s32.totalorder %s152, %s155
      %p161 = scmp.eq.s32.totalorder %s17, 0
      %p162 = por %p160, %p161
      %p163 = scmp.ne.s32.totalorder %s152, %s155
      %p164 = scmp.eq.s32.totalorder %s22, 1
      %p165 = por %p163, %p164
      %p166 = scmp.ne.s32.totalorder %s155, %s156
      %p167 = scmp.eq.s32.totalorder %s22, 0
      %p168 = por %p166, %p167
      %p169 = scmp.ne.s32.totalorder %s155, %s156
      %p170 = scmp.eq.s32.totalorder %s23, 1
      %p171 = por %p169, %p170
      %p173 = scmp.ne.s32.totalorder %s156, %s172
      %p174 = scmp.eq.s32.totalorder %s23, 0
      %p175 = por %p173, %p174
      %s176 = ssub.s32 %s24, %s43
      %p177 = scmp.eq.s32.totalorder %s176, 0
      %s179 = sadd.s32 %s178, 1
      %s180 = scalar_select %p177, %s178, %s179
      %p183 = pneg %p177
      %p184 = scmp.eq.s32.totalorder %s17, 1
      %p185 = por %p183, %p184
      %p186 = scmp.ne.s32.totalorder %s178, %s181
      %p187 = scmp.eq.s32.totalorder %s17, 0
      %p188 = por %p186, %p187
      %p189 = scmp.ne.s32.totalorder %s178, %s181
      %p190 = scmp.eq.s32.totalorder %s22, 1
      %p191 = por %p189, %p190
      %p192 = scmp.ne.s32.totalorder %s181, %s182
      %p193 = scmp.eq.s32.totalorder %s22, 0
      %p194 = por %p192, %p193
      %p195 = scmp.ne.s32.totalorder %s181, %s182
      %p196 = scmp.eq.s32.totalorder %s23, 1
      %p197 = por %p195, %p196
      %p199 = scmp.ne.s32.totalorder %s182, %s198
      %p200 = scmp.eq.s32.totalorder %s23, 0
      %p201 = por %p199, %p200
      %p202 = scmp.le.s32.totalorder 1, %s17
      %p203 = scmp.lt.s32.totalorder %s17, 3
      %p204 = pnand %p202, %p203
      %p205 = pneg %p204
      // Predicated region
      $region9: #{tpu_custom_call.1} parent=5 // pred_check
        _
      $region10: #{tpu_custom_call.1} parent=5 // pred_check_branch
        %207 = sbr.rel (%p204) target = $region12
      $region11: #{tpu_custom_call.1} parent=5 // pred_region
        %s208 = ssub.s32 %s17, 1
        // Predicated region
        $region13: #{tpu_custom_call.1} parent=11 // pred_check
          %p209 = pneg %p62
        $region14: #{tpu_custom_call.1} parent=11 // pred_check_branch
          %211 = sbr.rel (%p209) target = $region16
        $region15: #{tpu_custom_call.1} parent=11 // pred_region
          %s213 = ssub.s32 64, 64
          %214 = vsyncadd [#allocation8], %s213
          %s215 = smul.addr %s27, 2
          %s216 = smul.addr %s215, 64
          %s217 = scalar_lea.hbm %s0, %s216
          %s219 = sshll.u32 [#allocation7], 4
          %s220 = int_to_ptr.vmem [resolvable:$true] %s219
          %222 = dma.hbm_to_vmem [thread:$0]  %s217, 64, %s220, [#allocation8]
        $region16: #{tpu_custom_call.1} parent=11 // pred_fallthru
          _
        // Predicated region
        $region17: #{tpu_custom_call.1} parent=11 // pred_check
          %p223 = pneg %p116
        $region18: #{tpu_custom_call.1} parent=11 // pred_check_branch
          %225 = sbr.rel (%p223) target = $region20
        $region19: #{tpu_custom_call.1} parent=11 // pred_region
          %s227 = ssub.s32 128, 128
          %228 = vsyncadd [#allocation10], %s227
          %s229 = smul.addr %s27, 128
          %s230 = scalar_lea.hbm %s2, %s229
          %s232 = sshll.u32 [#allocation11], 4
          %s233 = int_to_ptr.vmem [resolvable:$true] %s232
          %235 = dma.hbm_to_vmem [thread:$0]  %s230, 128, %s233, [#allocation10]
        $region20: #{tpu_custom_call.1} parent=11 // pred_fallthru
          _
        // Predicated region
        $region21: #{tpu_custom_call.1} parent=11 // pred_check
          %p236 = pneg %p142
        $region22: #{tpu_custom_call.1} parent=11 // pred_check_branch
          %238 = sbr.rel (%p236) target = $region24
        $region23: #{tpu_custom_call.1} parent=11 // pred_region
          %s240 = ssub.s32 128, 128
          %241 = vsyncadd [#allocation13], %s240
          %s242 = smul.addr %s28, 128
          %s243 = scalar_lea.hbm %s3, %s242
          %s245 = sshll.u32 [#allocation12], 4
          %s246 = int_to_ptr.vmem [resolvable:$true] %s245
          %248 = dma.hbm_to_vmem [thread:$0]  %s243, 128, %s246, [#allocation13]
        $region24: #{tpu_custom_call.1} parent=11 // pred_fallthru
          _
      $region12: #{tpu_custom_call.1} parent=5 // pred_fallthru
        _
      %p249 = scmp.lt.s32.totalorder %s17, 2
      // Predicated region
      $region25: #{tpu_custom_call.1} parent=5 // pred_check
        %p250 = pneg %p249
      $region26: #{tpu_custom_call.1} parent=5 // pred_check_branch
        %252 = sbr.rel (%p250) target = $region28
      $region27: #{tpu_custom_call.1} parent=5 // pred_region
        // Predicated region
        $region29: #{tpu_custom_call.1} parent=27 // pred_check
          %p253 = pneg %p84
        $region30: #{tpu_custom_call.1} parent=27 // pred_check_branch
          %255 = sbr.rel (%p253) target = $region32
        $region31: #{tpu_custom_call.1} parent=27 // pred_region
          %s256 = sand.u32 %s17, 1
          %s257 = scalar_lea.sflag [#allocation10], %s256
          %s258 = sand.u32 %s74, 1
          %s259 = smul.addr %s258, 4
          %s260 = scalar_lea.vmem [#allocation9], %s259
          %s262 = ssub.s32 64, 64
          %263 = vsyncadd %s257, %s262
          %s264 = smul.addr %s25, 2
          %s265 = sadd.s32 %s26, %s264
          %s266 = smul.addr %s265, 64
          %s267 = scalar_lea.hbm %s1, %s266
          %s269 = sshll.u32 %s260, 4
          %s270 = int_to_ptr.vmem [resolvable:$true] %s269
          %272 = dma.hbm_to_vmem [thread:$0]  %s267, 64, %s270, %s257
        $region32: #{tpu_custom_call.1} parent=27 // pred_fallthru
          _
      $region28: #{tpu_custom_call.1} parent=5 // pred_fallthru
        _
      %p273 = scmp.le.s32.totalorder 1, %s17
      %p274 = scmp.lt.s32.totalorder %s17, 3
      %p275 = pnand %p273, %p274
      %p276 = pneg %p275
      // Predicated region
      $region33: #{tpu_custom_call.1} parent=5 // pred_check
        _
      $region34: #{tpu_custom_call.1} parent=5 // pred_check_branch
        %278 = sbr.rel (%p275) target = $region36
      $region35: #{tpu_custom_call.1} parent=5 // pred_region
        %s279 = ssub.s32 %s17, 1
        // Predicated region
        $region37: #{tpu_custom_call.1} parent=35 // pred_check
          %p280 = pneg %p62
        $region38: #{tpu_custom_call.1} parent=35 // pred_check_branch
          %282 = sbr.rel (%p280) target = $region40
        $region39: #{tpu_custom_call.1} parent=35 // pred_region
          %283 = dma.done [#allocation8], 64
        $region40: #{tpu_custom_call.1} parent=35 // pred_fallthru
          _
        %s284 = sand.u32 %s22, 1
        %s285 = scalar_lea.sflag [#allocation10], %s284
        %s286 = sand.u32 %s77, 1
        %s287 = smul.addr %s286, 4
        %s288 = scalar_lea.vmem [#allocation9], %s287
        // Predicated region
        $region41: #{tpu_custom_call.1} parent=35 // pred_check
          %p289 = pneg %p90
        $region42: #{tpu_custom_call.1} parent=35 // pred_check_branch
          %291 = sbr.rel (%p289) target = $region44
        $region43: #{tpu_custom_call.1} parent=35 // pred_region
          %292 = dma.done %s285, 64
        $region44: #{tpu_custom_call.1} parent=35 // pred_fallthru
          _
        // Predicated region
        $region45: #{tpu_custom_call.1} parent=35 // pred_check
          %p293 = pneg %p116
        $region46: #{tpu_custom_call.1} parent=35 // pred_check_branch
          %295 = sbr.rel (%p293) target = $region48
        $region47: #{tpu_custom_call.1} parent=35 // pred_region
          %296 = dma.done [#allocation10], 128
        $region48: #{tpu_custom_call.1} parent=35 // pred_fallthru
          _
        // Predicated region
        $region49: #{tpu_custom_call.1} parent=35 // pred_check
          %p297 = pneg %p142
        $region50: #{tpu_custom_call.1} parent=35 // pred_check_branch
          %299 = sbr.rel (%p297) target = $region52
        $region51: #{tpu_custom_call.1} parent=35 // pred_region
          %300 = dma.done [#allocation13], 128
        $region52: #{tpu_custom_call.1} parent=35 // pred_fallthru
          _
        %p301 = pneg %p62
        %p302 = pneg %p59
        %s303 = sand.u32 %s22, 1
        %s304 = scalar_lea.sflag [#allocation10], %s303
        %s305 = sand.u32 %s77, 1
        %s306 = smul.addr %s305, 4
        %s307 = scalar_lea.vmem [#allocation9], %s306
        %p308 = pneg %p90
        %p309 = pneg %p87
        %p310 = pneg %p116
        %p311 = pneg %p113
        %p312 = pneg %p142
        %p313 = pneg %p139
        %p314 = pneg %p168
        %p315 = pneg %p165
        %p316 = scmp.lt.s32.totalorder %s27, 0
        %s317 = scalar_select %p316, %s27, 0
        %s318 = smul.addr %s317, 8
        %s319 = scalar_lea.vmem %s4, %s318
        %p320 = pneg %p194
        %p321 = pneg %p191
        %p322 = scmp.lt.s32.totalorder %s27, 0
        %s323 = scalar_select %p322, %s27, 0
        %s324 = smul.addr %s323, 8
        %s325 = scalar_lea.vmem %s5, %s324
        %p326 = scmp.lt.s32.totalorder %s27, 0
        %s327 = scalar_select %p326, %s27, 0
        %s328 = smul.addr %s327, 8
        %s329 = scalar_lea.vmem %s4, %s328
        %p330 = scmp.lt.s32.totalorder %s27, 0
        %s331 = scalar_select %p330, %s27, 0
        %s332 = smul.addr %s331, 8
        %s333 = scalar_lea.vmem %s5, %s332
        %p335 = scmp.eq.s32.totalorder %s28, 0
        %p336 = scmp.eq.s32.totalorder %s29, 0
        %p337 = pnand %p335, %p336
        %p338 = pneg %p337
        // Predicated region
        $region53: #{tpu_custom_call.1} parent=35 // pred_check
          _
        $region54: #{tpu_custom_call.1} parent=35 // pred_check_branch
          %340 = sbr.rel (%p337) target = $region56
        $region55: #{tpu_custom_call.1} parent=35 // pred_region
          %vm341 = vcmask 7168
          %342 = vst.msk [vmem:[#allocation3] sm:$0xff] %vm341, -inf
          %343 = vst.msk [vmem:[#allocation4] sm:$0xff] %vm341, 0.0
          %344 = vst.msk [vmem:[#allocation5] sm:$0xff] %vm341, 0.0
          %345 = vst.msk [vmem:[#allocation6] sm:$0xff] %vm341, 0.0
        $region56: #{tpu_custom_call.1} parent=35 // pred_fallthru
          _
        // Predicated region
        $region57: #{tpu_custom_call.1} parent=35 // pred_check
          %p346 = pneg %p336
        $region58: #{tpu_custom_call.1} parent=35 // pred_check_branch
          %348 = sbr.rel (%p346) target = $region60
        $region59: #{tpu_custom_call.1} parent=35 // pred_region
          %v349 = vld [vmem:[#allocation11] sm:$0xff]
          %v350 = vld [vmem:[#allocation12] sm:$0xff]
          %vm351 = vcmask 48128
          %v353 = vsel %vm351, %v349, 0
          %v356 = vsel %vm351, %v350, 0
          %358 = vmatprep.subr.mxu0 0.0
          %359 = vmatpush1.xpose.msra.mxu0 0.0
          %360 = vmatprep.subr.mxu0 0.0
          %361 = vmatpush1.xpose.msra.mxu0 0.0
          %362 = vmatprep.subr.mxu0 0.0
          %363 = vmatpush1.xpose.msra.mxu0 0.0
          %364 = vmatprep.subr.mxu0 0.0
          %365 = vmatpush1.xpose.msra.mxu0 0.0
          %366 = vmatprep.subr.mxu0 0.0
          %367 = vmatpush1.xpose.msra.mxu0 0.0
          %368 = vmatprep.subr.mxu0 0.0
          %369 = vmatpush1.xpose.msra.mxu0 0.0
          %370 = vmatprep.subr.mxu0 0.0
          %371 = vmatpush1.xpose.msra.mxu0 0.0
          %372 = vmatprep.subr.mxu0 0.0
          %373 = vmatpush1.xpose.msra.mxu0 0.0
          %374 = vmatprep.subr.mxu0 0.0
          %375 = vmatpush1.xpose.msra.mxu0 0.0
          %376 = vmatprep.subr.mxu0 0.0
          %377 = vmatpush1.xpose.msra.mxu0 0.0
          %378 = vmatprep.subr.mxu0 0.0
          %379 = vmatpush1.xpose.msra.mxu0 0.0
          %380 = vmatprep.subr.mxu0 0.0
          %381 = vmatpush1.xpose.msra.mxu0 0.0
          %382 = vmatprep.subr.mxu0 0.0
          %383 = vmatpush1.xpose.msra.mxu0 0.0
          %384 = vmatprep.subr.mxu0 0.0
          %385 = vmatpush1.xpose.msra.mxu0 0.0
          %386 = vmatprep.subr.mxu0 0.0
          %387 = vmatpush1.xpose.msra.mxu0 0.0
          %388 = vmatprep.subr.mxu0 0.0
          %389 = vmatpush1.xpose.msra.mxu0 %v356
          %390 = vmatprep.subr.mxu0 0.0
          %391 = vmatpush2.xpose.msra.mxu0 0.0
          %392 = vmatprep.subr.mxu0 0.0
          %393 = vmatpush2.xpose.msra.mxu0 0.0
          %394 = vmatprep.subr.mxu0 0.0
          %395 = vmatpush2.xpose.msra.mxu0 0.0
          %396 = vmatprep.subr.mxu0 0.0
          %397 = vmatpush2.xpose.msra.mxu0 0.0
          %398 = vmatprep.subr.mxu0 0.0
          %399 = vmatpush2.xpose.msra.mxu0 0.0
          %400 = vmatprep.subr.mxu0 0.0
          %401 = vmatpush2.xpose.msra.mxu0 0.0
          %402 = vmatprep.subr.mxu0 0.0
          %403 = vmatpush2.xpose.msra.mxu0 0.0
          %404 = vmatprep.subr.mxu0 0.0
          %405 = vmatpush2.xpose.msra.mxu0 0.0
          %406 = vmatprep.subr.mxu0 0.0
          %407 = vmatpush2.xpose.msra.mxu0 0.0
          %408 = vmatprep.subr.mxu0 0.0
          %409 = vmatpush2.xpose.msra.mxu0 0.0
          %410 = vmatprep.subr.mxu0 0.0
          %411 = vmatpush2.xpose.msra.mxu0 0.0
          %412 = vmatprep.subr.mxu0 0.0
          %413 = vmatpush2.xpose.msra.mxu0 0.0
          %414 = vmatprep.subr.mxu0 0.0
          %415 = vmatpush2.xpose.msra.mxu0 0.0
          %416 = vmatprep.subr.mxu0 0.0
          %417 = vmatpush2.xpose.msra.mxu0 0.0
          %418 = vmatprep.subr.mxu0 0.0
          %419 = vmatpush2.xpose.msra.mxu0 0.0
          %420 = vmatprep.subr.mxu0 0.0
          %421 = vmatpush2.xpose.msra.mxu0 0.0
          %422 = vmatprep.mubr.f32.mxu0 0.0
          %423 = vmatmul.mubr.f32.gmra.mxu0 %v353
          %v424 = vpop.f32.mrf.mxu0
          %v425 = vadd.f32 0.0, %v424
          %v426 = vpop.f32.mrf.mxu0
          %427 = vdwg.mxu0
          %v428 = vsel %vm351, %v349, 0.0
          %429 = vadd.xlane.f32.xlu0 %v428
          %v430 = vpop.xlane.xlu0 %429
          %v431 = vsel %vm351, %v350, 0.0
          %432 = vadd.xlane.f32.xlu0 %v431
          %v433 = vpop.xlane.xlu0 %432
          %434 = vxpose.xlu0.b32.start [1/16] %v433, 128
          %435 = vxpose.xlu0.b32.cont [2/16] 0.0, 128
          %436 = vxpose.xlu0.b32.cont [3/16] 0.0, 128
          %437 = vxpose.xlu0.b32.cont [4/16] 0.0, 128
          %438 = vxpose.xlu0.b32.cont [5/16] 0.0, 128
          %439 = vxpose.xlu0.b32.cont [6/16] 0.0, 128
          %440 = vxpose.xlu0.b32.cont [7/16] 0.0, 128
          %441 = vxpose.xlu0.b32.cont [8/16] 0.0, 128
          %442 = vxpose.xlu0.b32.cont [9/16] 0.0, 128
          %443 = vxpose.xlu0.b32.cont [10/16] 0.0, 128
          %444 = vxpose.xlu0.b32.cont [11/16] 0.0, 128
          %445 = vxpose.xlu0.b32.cont [12/16] 0.0, 128
          %446 = vxpose.xlu0.b32.cont [13/16] 0.0, 128
          %447 = vxpose.xlu0.b32.cont [14/16] 0.0, 128
          %448 = vxpose.xlu0.b32.cont [15/16] 0.0, 128
          %449 = vxpose.xlu0.b32.end [16/16] 0.0, 128
          %v450 = vpop.trf.xlu0
          %v451 = vpop.trf.xlu0
          %v452 = vpop.trf.xlu0
          %v453 = vpop.trf.xlu0
          %v454 = vpop.trf.xlu0
          %v455 = vpop.trf.xlu0
          %v456 = vpop.trf.xlu0
          %v457 = vpop.trf.xlu0
          %v458 = vpop.trf.xlu0
          %v459 = vpop.trf.xlu0
          %v460 = vpop.trf.xlu0
          %v461 = vpop.trf.xlu0
          %v462 = vpop.trf.xlu0
          %v463 = vpop.trf.xlu0
          %v464 = vpop.trf.xlu0
          %v465 = vpop.trf.xlu0
          %v466 = vlaneseq
          %v467 = vshrl.u32 %v466, 7
          %v468 = vsub.s32 0, %v467
          %v469 = vrot.slane %v450, %v468
          %v470 = vadd.f32 %v430, %v469
          %v471 = vsub.f32 %v470, %v425
          %v472 = vadd.f32 %v471, 1e-06
          %v473 = vrcp.pop %v472
          %v474 = vmul.f32 %v425, %v473
          %vm475 = vcmp.ge.f32.partialorder %v474, 0.5
          %v476 = vsel %vm475, 1, 0
          %v477 = vcvt.s32.f32 %v476
          %s478 = smul.u32 %s28, 8
          %v479 = vlaneseq
          %v480 = vand.u32 %v479, 127
          %v481 = vstv %s478
          %v482 = vadd.s32 %v481, %v480
          %vm483 = vcmp.lt.s32.totalorder %v482, 4
          %v484 = vsel %vm483, 1, 0
          %vm485 = vcmp.eq.s32.totalorder %v484, 1
          %v486 = vsel %vm485, %v477, 0.0
          %v487 = vld [vmem:[#allocation6] sm:$0xff]
          %vm488 = vcmask 64512
          %v489 = vsel %vm488, %v486, 0.0
          %490 = vadd.xlane.f32.xlu0 %v489
          %v491 = vpop.xlane.xlu0 %490
          %v492 = vadd.f32 %v487, %v491
          %vm493 = vcmask 7168
          %494 = vst.msk [vmem:[#allocation6] sm:$0xff] %vm493, %v492
          %v495 = vpack.c.bf16 %v486, %v486
          %vm496 = vcmask 60416
          %497 = vst.msk [vmem:[#allocation2] sm:$0xf] %vm496, %v495
        $region60: #{tpu_custom_call.1} parent=35 // pred_fallthru
          _
        %v498 = vld [vmem:[#allocation7] sm:$0xf]
        %v499 = vld [vmem:[%s288] sm:$0xf]
        %500 = vmatprep.subr.bf16.mxu0 0
        %501 = vmatpush1.bf16.xpose.msra.mxu0 0
        %502 = vmatprep.subr.bf16.mxu0 0
        %503 = vmatpush1.bf16.xpose.msra.mxu0 0
        %504 = vmatprep.subr.bf16.mxu0 0
        %505 = vmatpush1.bf16.xpose.msra.mxu0 0
        %506 = vmatprep.subr.bf16.mxu0 0
        %507 = vmatpush1.bf16.xpose.msra.mxu0 0
        %508 = vmatprep.subr.bf16.mxu0 0
        %509 = vmatpush1.bf16.xpose.msra.mxu0 0
        %510 = vmatprep.subr.bf16.mxu0 0
        %511 = vmatpush1.bf16.xpose.msra.mxu0 0
        %512 = vmatprep.subr.bf16.mxu0 0
        %513 = vmatpush1.bf16.xpose.msra.mxu0 0
        %514 = vmatprep.subr.bf16.mxu0 0
        %515 = vmatpush1.bf16.xpose.msra.mxu0 %v499
        %516 = vmatprep.subr.bf16.mxu0 0
        %517 = vmatpush2.bf16.xpose.msra.mxu0 0
        %518 = vmatprep.subr.bf16.mxu0 0
        %519 = vmatpush2.bf16.xpose.msra.mxu0 0
        %520 = vmatprep.subr.bf16.mxu0 0
        %521 = vmatpush2.bf16.xpose.msra.mxu0 0
        %522 = vmatprep.subr.bf16.mxu0 0
        %523 = vmatpush2.bf16.xpose.msra.mxu0 0
        %524 = vmatprep.subr.bf16.mxu0 0
        %525 = vmatpush2.bf16.xpose.msra.mxu0 0
        %526 = vmatprep.subr.bf16.mxu0 0
        %527 = vmatpush2.bf16.xpose.msra.mxu0 0
        %528 = vmatprep.subr.bf16.mxu0 0
        %529 = vmatpush2.bf16.xpose.msra.mxu0 0
        %530 = vmatprep.subr.bf16.mxu0 0
        %531 = vmatpush2.bf16.xpose.msra.mxu0 0
        %532 = vmatprep.mubr.bf16.mxu0 0
        %533 = vmatmul.mubr.bf16.gmra.mxu0 %v498
        %v534 = vpop.f32.mrf.mxu0
        %v535 = vadd.f32 0.0, %v534
        %v536 = vpop.f32.mrf.mxu0
        %v537 = vpop.f32.mrf.mxu0
        %v538 = vpop.f32.mrf.mxu0
        %539 = vdwg.mxu0
        %v540 = vmul.f32 %v535, 14.285714
        %v541 = vld [vmem:[#allocation3] sm:$0xff]
        %vm542 = vcmask 64512
        %v543 = vsel %vm542, %v540, -inf
        %544 = vmax.xlane.f32.xlu0 %v543
        %v545 = vpop.xlane.xlu0 %544
        %v546 = vmax.f32 %v541, %v545
        %v547 = vsub.f32 %v541, %v546
        %v548 = vmul.f32 %v547, 1.442695
        %v549 = vpow.pop %v548
        %551 = vset.pattern.permute.xlu0 0
        %552 = vperm.xlu0 %551, %v546
        %v553 = vpop.permute.xlu0 %552
        %v555 = vsub.f32 %v540, %v553
        %v556 = vmul.f32 %v555, 1.442695
        %v557 = vpow.pop %v556
        %vm558 = vcmask 7168
        %559 = vst.msk [vmem:[#allocation3] sm:$0xff] %vm558, %v546
        %p560 = scmp.eq.s32.totalorder %s27, %s28
        %p561 = pnand %p560, %p336
        %p562 = pneg %p561
        %p563 = por %p562, %p335
        // Predicated region
        $region61: #{tpu_custom_call.1} parent=35 // pred_check
          %p564 = pneg %p563
        $region62: #{tpu_custom_call.1} parent=35 // pred_check_branch
          %566 = sbr.rel (%p564) target = $region64
        $region63: #{tpu_custom_call.1} parent=35 // pred_region
          %s567 = smul.u32 %s27, 8
          %v568 = vlaneseq
          %v569 = vshrl.u32 %v568, 7
          %v570 = vstv %s567
          %v571 = vadd.s32 %v570, %v569
          %s572 = smul.u32 %s28, 8
          %v573 = vlaneseq
          %v574 = vand.u32 %v573, 127
          %v575 = vstv %s572
          %v576 = vadd.s32 %v575, %v574
          %vm577 = vcmp.eq.s32.totalorder %v571, %v576
          %s578 = scalar_select %p336, 1, 0
          %v579 = vstv %s578
          %vm580 = vcmp.eq.s32.totalorder %v579, 1
          %vm581 = vmand %vm577, %vm580
          %vm582 = vmxor %vm581, 1
          %vm583 = vcmp.lt.s32.totalorder %v576, 4
          %v584 = vsel %vm583, 1, 0
          %vm585 = vcmp.eq.s32.totalorder %v584, 1
          %vm586 = vmand %vm582, %vm585
          %v587 = vsel %vm586, %v557, 0.0
          %v588 = vld [vmem:[#allocation4] sm:$0xff]
          %v589 = vmul.f32 %v549, %v588
          %v590 = vsel %vm542, %v587, 0.0
          %591 = vadd.xlane.f32.xlu0 %v590
          %v592 = vpop.xlane.xlu0 %591
          %v593 = vadd.f32 %v589, %v592
          %594 = vst.msk [vmem:[#allocation4] sm:$0xff] %vm558, %v593
          %v595 = vld [vmem:[#allocation5] sm:$0xff]
          %v596 = vmul.f32 %v549, %v595
          %v597 = vld [vmem:[#allocation2] sm:$0xf]
          %v598 = vunpack.c.l.bf16 %v597
          %v599 = vmul.f32 %v598, %v587
          %v600 = vsel %vm542, %v599, 0.0
          %601 = vadd.xlane.f32.xlu0 %v600
          %v602 = vpop.xlane.xlu0 %601
          %v603 = vadd.f32 %v596, %v602
          %604 = vst.msk [vmem:[#allocation5] sm:$0xff] %vm558, %v603
        $region64: #{tpu_custom_call.1} parent=35 // pred_fallthru
          _
        %p605 = pneg %p563
        // Predicated region
        $region65: #{tpu_custom_call.1} parent=35 // pred_check
          _
        $region66: #{tpu_custom_call.1} parent=35 // pred_check_branch
          %607 = sbr.rel (%p563) target = $region68
        $region67: #{tpu_custom_call.1} parent=35 // pred_region
          %v608 = vld [vmem:[#allocation4] sm:$0xff]
          %v609 = vmul.f32 %v549, %v608
          %v610 = vsel %vm542, %v557, 0.0
          %611 = vadd.xlane.f32.xlu0 %v610
          %v612 = vpop.xlane.xlu0 %611
          %v613 = vadd.f32 %v609, %v612
          %614 = vst.msk [vmem:[#allocation4] sm:$0xff] %vm558, %v613
          %v615 = vld [vmem:[#allocation5] sm:$0xff]
          %v616 = vmul.f32 %v549, %v615
          %v617 = vld [vmem:[#allocation2] sm:$0xf]
          %v618 = vunpack.c.l.bf16 %v617
          %v619 = vmul.f32 %v618, %v557
          %v620 = vsel %vm542, %v619, 0.0
          %621 = vadd.xlane.f32.xlu0 %v620
          %v622 = vpop.xlane.xlu0 %621
          %v623 = vadd.f32 %v616, %v622
          %624 = vst.msk [vmem:[#allocation5] sm:$0xff] %vm558, %v623
        $region68: #{tpu_custom_call.1} parent=35 // pred_fallthru
          _
        %p625 = scmp.eq.s32.totalorder %s29, 1
        %p626 = pnand %p335, %p625
        %p627 = pneg %p626
        // Predicated region
        $region69: #{tpu_custom_call.1} parent=35 // pred_check
          _
        $region70: #{tpu_custom_call.1} parent=35 // pred_check_branch
          %629 = sbr.rel (%p626) target = $region72
        $region71: #{tpu_custom_call.1} parent=35 // pred_region
          %v630 = vld [vmem:[#allocation11] sm:$0xff]
          %vm631 = vcmask 48128
          %v632 = vsel %vm631, %v630, 0.0
          %633 = vadd.xlane.f32.xlu0 %v632
          %v634 = vpop.xlane.xlu0 %633
          %v635 = vmul.f32 %v630, %v630
          %v636 = vsel %vm631, %v635, 0.0
          %637 = vadd.xlane.f32.xlu0 %v636
          %v638 = vpop.xlane.xlu0 %637
          %v639 = vmul.f32 %v634, 2.0
          %v640 = vsub.f32 %v639, %v638
          %v641 = vadd.f32 %v640, 1e-06
          %v642 = vrcp.pop %v641
          %v643 = vmul.f32 %v638, %v642
          %vm644 = vcmp.ge.f32.partialorder %v643, 0.5
          %v645 = vsel %vm644, 1, 0
          %v646 = vcvt.s32.f32 %v645
          %v647 = vld [vmem:[#allocation6] sm:$0xff]
          %v648 = vmul.f32 %v647, 2.0
          %v649 = vsub.f32 %v648, %v646
          %s650 = smul.u32 %s27, 8
          %v651 = vlaneseq
          %v652 = vshrl.u32 %v651, 7
          %v653 = vstv %s650
          %v654 = vadd.s32 %v653, %v652
          %vm655 = vcmp.gt.f32.partialorder %v649, 0.0
          %vm656 = vcmp.lt.s32.totalorder %v654, 4
          %vm657 = vmand %vm655, %vm656
          %v658 = vld [vmem:[#allocation5] sm:$0xff]
          %v659 = vld [vmem:[#allocation4] sm:$0xff]
          %v660 = vadd.f32 %v659, 1e-08
          %v661 = vrcp.pop %v660
          %v662 = vmul.f32 %v658, %v661
          %v663 = vlog2.pop %v662
          %v664 = vmul.f32 %v663, 0.6931472
          %v665 = vsub.f32 0.0, %v664
          %v666 = vsel %vm657, %v665, 0.0
          %667 = vst.msk [vmem:[%s329] sm:$0xff] %vm558, %v666
          %v668 = vsel %vm657, 1, 0
          %v669 = vcvt.s32.f32 %v668
          %670 = vst.msk [vmem:[%s333] sm:$0xff] %vm558, %v669
        $region72: #{tpu_custom_call.1} parent=35 // pred_fallthru
          _
        %p671 = scmp.lt.s32.totalorder %s27, 0
        %s672 = scalar_select %p671, %s27, 0
        %s673 = smul.addr %s672, 8
        %s674 = scalar_lea.vmem %s4, %s673
        %p675 = scmp.lt.s32.totalorder %s27, 0
        %s676 = scalar_select %p675, %s27, 0
        %s677 = smul.addr %s676, 8
        %s678 = scalar_lea.vmem %s5, %s677
        // Predicated region
        $region73: #{tpu_custom_call.1} parent=35 // pred_check
          %p679 = pneg %p165
        $region74: #{tpu_custom_call.1} parent=35 // pred_check_branch
          %681 = sbr.rel (%p679) target = $region76
        $region75: #{tpu_custom_call.1} parent=35 // pred_region
          _
        $region76: #{tpu_custom_call.1} parent=35 // pred_fallthru
          _
        // Predicated region
        $region77: #{tpu_custom_call.1} parent=35 // pred_check
          %p682 = pneg %p191
        $region78: #{tpu_custom_call.1} parent=35 // pred_check_branch
          %684 = sbr.rel (%p682) target = $region80
        $region79: #{tpu_custom_call.1} parent=35 // pred_region
          _
        $region80: #{tpu_custom_call.1} parent=35 // pred_fallthru
          _
        // Predicated region
        $region81: #{tpu_custom_call.1} parent=35 // pred_check
          %p685 = pneg %p165
        $region82: #{tpu_custom_call.1} parent=35 // pred_check_branch
          %687 = sbr.rel (%p685) target = $region84
        $region83: #{tpu_custom_call.1} parent=35 // pred_region
          %p688 = scmp.lt.s32.totalorder %s27, 0
          %s689 = scalar_select %p688, %s27, 0
          %s690 = smul.addr %s689, 8
          %s691 = scalar_lea.vmem %s4, %s690
        $region84: #{tpu_custom_call.1} parent=35 // pred_fallthru
          _
        // Predicated region
        $region85: #{tpu_custom_call.1} parent=35 // pred_check
          %p692 = pneg %p191
        $region86: #{tpu_custom_call.1} parent=35 // pred_check_branch
          %694 = sbr.rel (%p692) target = $region88
        $region87: #{tpu_custom_call.1} parent=35 // pred_region
          %p695 = scmp.lt.s32.totalorder %s27, 0
          %s696 = scalar_select %p695, %s27, 0
          %s697 = smul.addr %s696, 8
          %s698 = scalar_lea.vmem %s5, %s697
        $region88: #{tpu_custom_call.1} parent=35 // pred_fallthru
          _
      $region36: #{tpu_custom_call.1} parent=5 // pred_fallthru
        _
      %p699 = scmp.le.s32.totalorder 2, %s17
      // Predicated region
      $region89: #{tpu_custom_call.1} parent=5 // pred_check
        %p700 = pneg %p699
      $region90: #{tpu_custom_call.1} parent=5 // pred_check_branch
        %702 = sbr.rel (%p700) target = $region92
      $region91: #{tpu_custom_call.1} parent=5 // pred_region
        %s703 = ssub.s32 %s17, 2
      $region92: #{tpu_custom_call.1} parent=5 // pred_fallthru
        _
    $region6: #{tpu_custom_call.1} parent=1 // loop_footer
      %s21 = sadd.s32 1, %s17
    $region7: #{tpu_custom_call.1} parent=1 // loop_footer_branch
      %16 = sbr.rel target = $region3
    $region8: #{tpu_custom_call.1} parent=1 // loop_exit
      _
    %704 = vsyncpa [#allocation8], 1
    %s705 = scalar_lea.sflag [#allocation8], 1
    %706 = vsyncpa %s705, 1
    %707 = vsyncpa [#allocation10], 1
    %s708 = scalar_lea.sflag [#allocation10], 1
    %709 = vsyncpa %s708, 1
    %710 = vsyncpa [#allocation13], 1

</llo_original>
